<compile_context>
chip_gen: v7x
topology: tpu7x:2x2x1
jax: 0.10.0
libtpu: 0.0.40
codegen_flags: <defaults>
</compile_context>

<pallas_src>
import functools

import jax
import jax.numpy as jnp
from jax.experimental import pallas as pl
from jax.experimental.pallas import tpu as pltpu

LANE = 128
SUBLANE = 8
_MAX_TILE_ROWS = 2048                 # 2048 x 128 f32 = 1 MiB per input buffer
_VMEM_LIMIT_BYTES = 32 * 1024 * 1024  # <= physical VMEM on v5e/v6e/v7x


def _num_tensorcores():
    """2-way core split only on v7x (2 TensorCores/chip); 1 on v5e/v6e."""
    try:
        kind = jax.devices()[0].device_kind.lower()
    except Exception:
        return 1
    return 2 if ("v7" in kind or "7x" in kind) else 1


# ---------------- elementwise summands (with their neutral pad values) ------
def _ce_elementwise(x, y):
    # CE summand: log(x) * y  (no clamp, matches torch.log semantics)
    return jnp.log(x) * y


def _sqdiff_elementwise(a, b):
    d = a - b
    return d * d


# ---------------- fused streaming-sum kernel --------------------------------
def _fused_sum_kernel(*refs, pair_specs, rows, tile_rows, steps,
                      full_blocks, total_steps):
    """out[c] += sum_j scale_j * ew_j(a_j, b_j) folded into an (8,128) block."""
    out_ref = refs[-1]
    in_refs = refs[:-1]
    n_pairs = len(pair_specs)

    c = pl.program_id(0)   # core split (CORE_PARALLEL on v7x, size 1 elsewhere)
    i = pl.program_id(1)   # reduction step ("arbitrary")
    i_global = c * steps + i

    @pl.when(i == 0)
    def _init():
        out_ref[...] = jnp.zeros_like(out_ref)

    # Stream in native dtype; upcast in-kernel (hidden under the DMA).
    vals = [r[...].astype(jnp.float32) for r in in_refs]
    pairs = [(vals[2 * j], vals[2 * j + 1]) for j in range(n_pairs)]

    def accumulate(pair_vals):
        total = None
        for (ew, scale, _na, _nb), (a, b) in zip(pair_specs, pair_vals):
            contrib = ew(a, b) * jnp.float32(scale)
            total = contrib if total is None else total + contrib
        # Fold tile rows into the vreg-shaped (8,128) resident accumulator with
        # cheap VPU adds; the single cross-lane reduce happens in the wrapper.
        out_ref[...] += total.reshape(
            tile_rows // SUBLANE, SUBLANE, LANE).sum(axis=0)

    def masked_pairs():
        # Mask *inputs* to neutral values so elementwise (incl. log) never sees
        # undefined partial-block contents, and clamped redundant core-split
        # steps contribute exactly zero.  (tile_rows,1) iota, lane-broadcast.
        start_row = i_global * tile_rows
        row_ok = (start_row + jax.lax.broadcasted_iota(
            jnp.int32, (tile_rows, 1), 0)) < rows
        out = []
        for (_ew, _scale, na, nb), (a, b) in zip(pair_specs, pairs):
            out.append((jnp.where(row_ok, a, jnp.float32(na)),
                        jnp.where(row_ok, b, jnp.float32(nb))))
        return out

    has_interior = full_blocks > 0              # static Python decisions:
    has_boundary = total_steps > full_blocks    # only emit the branches needed

    if has_interior and has_boundary:
        @pl.when(i_global < full_blocks)
        def _interior():
            accumulate(pairs)

        @pl.when(i_global >= full_blocks)
        def _boundary():
            accumulate(masked_pairs())
    elif has_interior:
        accumulate(pairs)           # no mask work at all on aligned shapes
    else:
        accumulate(masked_pairs())


# ---------------- wrapper ----------------------------------------------------
def _prep_lane_slab(x, neutral):
    """Flatten to a lane-dense (rows,128) slab, rows % 8 == 0.

    Zero-copy reshape when x.size is a multiple of 8*128 (typical NCHW sizes);
    otherwise pad with the op's neutral value (contributes exactly zero).
    """
    flat = x.reshape(-1)
    chunk = SUBLANE * LANE
    rem = flat.size % chunk
    if rem:
        # TODO(synk): rare ragged path pays one small HBM copy for the pad;
        # aligned sizes take the zero-copy reshape.
        flat = jnp.concatenate(
            [flat, jnp.full((chunk - rem,), neutral, flat.dtype)])
    return flat.reshape(flat.size // LANE, LANE)


def _padded_rows(n):
    return pl.cdiv(n, SUBLANE * LANE) * SUBLANE


def _fused_streaming_sum(pair_specs, pairs):
    """sum_j scale_j * sum(ew_j(a_j, b_j)) via one fused pallas_call.

    pair_specs: list of (elementwise, scale, neutral_a, neutral_b)
    pairs:      list of (a, b) arrays; all pairs must flatten to the same
                number of 128-lane rows (after neutral padding).
    """
    slabs = []
    rows = None
    for (_ew, _scale, na, nb), (a, b) in zip(pair_specs, pairs):
        assert a.shape == b.shape
        a2 = _prep_lane_slab(a, na)
        b2 = _prep_lane_slab(b, nb)
        assert rows is None or a2.shape[0] == rows, "mismatched pair sizes"
        rows = a2.shape[0]
        slabs += [a2, b2]

    tile_rows = min(_MAX_TILE_ROWS, rows)     # rows is a multiple of 8
    row_blocks = pl.cdiv(rows, tile_rows)
    full_blocks = rows // tile_rows           # blocks with no partial rows

    ncores = _num_tensorcores()
    if row_blocks < ncores:
        ncores = 1
    steps = pl.cdiv(row_blocks, ncores)

    def block_index(c, i):
        # Clamp redundant trailing steps of the core split onto the last block;
        # the kernel masks their contribution to exactly zero.
        return jnp.minimum(c * steps + i, row_blocks - 1)

    in_specs = [
        pl.BlockSpec((tile_rows, LANE), lambda c, i: (block_index(c, i), 0))
        for _ in slabs
    ]

    kernel = functools.partial(
        _fused_sum_kernel,
        pair_specs=tuple(pair_specs),
        rows=rows, tile_rows=tile_rows, steps=steps,
        full_blocks=full_blocks, total_steps=ncores * steps)

    dim_sem = ((pltpu.CORE_PARALLEL, pltpu.ARBITRARY) if ncores > 1
               else (pltpu.ARBITRARY, pltpu.ARBITRARY))

    partials = pl.pallas_call(
        kernel,
        out_shape=jax.ShapeDtypeStruct((ncores, SUBLANE, LANE), jnp.float32),
        grid_spec=pltpu.PrefetchScalarGridSpec(
            num_scalar_prefetch=0,
            grid=(ncores, steps),
            in_specs=in_specs,
            out_specs=pl.BlockSpec((None, SUBLANE, LANE),
                                   lambda c, i: (c, 0, 0)),
        ),
        compiler_params=pltpu.CompilerParams(
            dimension_semantics=dim_sem,
            vmem_limit_bytes=_VMEM_LIMIT_BYTES),
    )(*slabs)

    # Single tiny final reduce over (ncores, 8, 128) partials.
    return jnp.sum(partials)


# ---------------- public losses ----------------------------------------------
def ce_loss(y, x):
    """CE_Loss.forward(y, x): -sum(log(x) * y) / (H * W)."""
    assert x.shape == y.shape and x.ndim == 4
    S = x.shape[2] * x.shape[3]
    return _fused_streaming_sum(
        [(_ce_elementwise, -1.0 / float(S), 1.0, 0.0)], [(x, y)])


def mse_loss(a, b):
    """MSE_Loss.forward(a, b): mean((a - b)^2)."""
    assert a.shape == b.shape
    return _fused_streaming_sum(
        [(_sqdiff_elementwise, 1.0 / float(a.size), 0.0, 0.0)], [(a, b)])


@functools.partial(jax.jit, static_argnames=("lam",))
def ml_loss(y1, x1, y2, x2, t1, t2, lam=200.0):
    """ML_Loss.forward: CE(y1, x1) + CE(y2, x2) + lam * MSE(t1, t2)."""
    assert x1.shape == y1.shape and x1.ndim == 4
    assert x2.shape == y2.shape and x2.ndim == 4
    assert t1.shape == t2.shape
    S1 = x1.shape[2] * x1.shape[3]
    S2 = x2.shape[2] * x2.shape[3]

    specs = [
        (_ce_elementwise, -1.0 / float(S1), 1.0, 0.0),           # CE(y1, x1)
        (_ce_elementwise, -1.0 / float(S2), 1.0, 0.0),           # CE(y2, x2)
        (_sqdiff_elementwise, float(lam) / float(t1.size), 0.0, 0.0),  # lam*MSE
    ]
    pairs = [(x1, y1), (x2, y2), (t1, t2)]

    if _padded_rows(x1.size) == _padded_rows(x2.size) == _padded_rows(t1.size):
        # Fully fused: one kernel streams all six tensors.
        return _fused_streaming_sum(specs, pairs)

    # Mismatched sizes: fall back to three streaming calls (still correct).
    return (_fused_streaming_sum(specs[:1], pairs[:1])
            + _fused_streaming_sum(specs[1:2], pairs[1:2])
            + _fused_streaming_sum(specs[2:3], pairs[2:3]))


# ---------------- self-test ---------------------------------------------------
def _reference(y1, x1, y2, x2, t1, t2, lam):
    S1 = x1.shape[2] * x1.shape[3]
    S2 = x2.shape[2] * x2.shape[3]
    ce1 = -jnp.sum(jnp.log(x1) * y1) / S1
    ce2 = -jnp.sum(jnp.log(x2) * y2) / S2
    mse = jnp.mean((t1 - t2) ** 2)
    return ce1 + ce2 + lam * mse


def _make_inputs(key, shape):
    k1, k2, k3, k4, k5, k6 = jax.random.split(key, 6)
    x1 = jax.random.uniform(k1, shape, jnp.float32, minval=0.1, maxval=1.0)
    y1 = jax.random.uniform(k2, shape, jnp.float32, minval=0.0, maxval=1.0)
    x2 = jax.random.uniform(k3, shape, jnp.float32, minval=0.1, maxval=1.0)
    y2 = jax.random.uniform(k4, shape, jnp.float32, minval=0.0, maxval=1.0)
    t1 = jax.random.uniform(k5, shape, jnp.float32)
    t2 = jax.random.uniform(k6, shape, jnp.float32)
    return y1, x1, y2, x2, t1, t2


if __name__ == "__main__":
    lam = 200.0
    key = jax.random.PRNGKey(0)
    k_small, k_big = jax.random.split(key, 2)

    # Small aligned case (single full tile, no mask branch emitted).
    args_small = _make_inputs(k_small, (2, 4, 16, 16))
    loss_small = ml_loss(*args_small, lam=lam)
    jax.block_until_ready(loss_small)
    ref_small = _reference(*args_small, lam=lam)
    assert jnp.allclose(loss_small, ref_small, rtol=1e-5, atol=1e-5), (
        loss_small, ref_small)

    # Larger case exercising multi-tile streaming, the gated boundary-mask
    # branch (rows % tile_rows != 0) and the neutral ragged-row pad.
    args_big = _make_inputs(k_big, (2, 4, 200, 200))
    loss_big = ml_loss(*args_big, lam=lam)
    jax.block_until_ready(loss_big)
    ref_big = _reference(*args_big, lam=lam)
    assert jnp.allclose(loss_big, ref_big, rtol=1e-4, atol=1e-4), (
        loss_big, ref_big)

    print("KERNEL_OK")
</pallas_src>

<mosaic_0001>
module attributes {stable_mosaic.version = 11 : i64} {
  func.func @_fused_sum_kernel(%arg0: i32, %arg1: i32, %arg2: memref<16x128xf32, #tpu.memory_space<vmem>>, %arg3: memref<16x128xf32, #tpu.memory_space<vmem>>, %arg4: memref<16x128xf32, #tpu.memory_space<vmem>>, %arg5: memref<16x128xf32, #tpu.memory_space<vmem>>, %arg6: memref<16x128xf32, #tpu.memory_space<vmem>>, %arg7: memref<16x128xf32, #tpu.memory_space<vmem>>, %arg8: memref<1x8x128xf32, #tpu.memory_space<vmem>>) attributes {dimension_semantics = [#tpu.dimension_semantics<arbitrary>, #tpu.dimension_semantics<arbitrary>], iteration_bounds = array<i64: 1, 1>, scalar_prefetch = 0 : i64, scratch_operands = 0 : i64, tpu.core_type = #tpu.core_type<tc>, window_params = [{transform_indices = @transform_0, window_bounds = array<i64: 16, 128>}, {transform_indices = @transform_1, window_bounds = array<i64: 16, 128>}, {transform_indices = @transform_2, window_bounds = array<i64: 16, 128>}, {transform_indices = @transform_3, window_bounds = array<i64: 16, 128>}, {transform_indices = @transform_4, window_bounds = array<i64: 16, 128>}, {transform_indices = @transform_5, window_bounds = array<i64: 16, 128>}, {transform_indices = @transform_6, window_bounds = array<i64: 1, 8, 128>}]} {
    %c0_i32 = arith.constant 0 : i32
    %0 = arith.cmpi eq, %arg1, %c0_i32 : i32
    %1 = arith.extui %0 : i1 to i32
    %c0_i32_0 = arith.constant 0 : i32
    %2 = arith.cmpi ne, %1, %c0_i32_0 : i32
    scf.if %2 {
      %cst_21 = arith.constant 0.000000e+00 : f32
      %31 = vector.broadcast %cst_21 : f32 to vector<8x128xf32>
      %c0_22 = arith.constant 0 : index
      %c0_23 = arith.constant 0 : index
      %c0_24 = arith.constant 0 : index
      %32 = vector.load %arg8[%c0_22, %c0_23, %c0_24] : memref<1x8x128xf32, #tpu.memory_space<vmem>>, vector<1x8x128xf32>
      %33 = vector.shape_cast %32 : vector<1x8x128xf32> to vector<8x128xf32>
      %34 = vector.shape_cast %31 : vector<8x128xf32> to vector<1x8x128xf32>
      tpu.vector_store %arg8[%c0_22, %c0_23, %c0_24], %34 {strides = array<i32>} : memref<1x8x128xf32, #tpu.memory_space<vmem>>, vector<1x8x128xf32>,
    } else {
    }
    %c0 = arith.constant 0 : index
    %c0_1 = arith.constant 0 : index
    %3 = vector.load %arg2[%c0, %c0_1] : memref<16x128xf32, #tpu.memory_space<vmem>>, vector<16x128xf32>
    %c0_2 = arith.constant 0 : index
    %c0_3 = arith.constant 0 : index
    %4 = vector.load %arg3[%c0_2, %c0_3] : memref<16x128xf32, #tpu.memory_space<vmem>>, vector<16x128xf32>
    %c0_4 = arith.constant 0 : index
    %c0_5 = arith.constant 0 : index
    %5 = vector.load %arg4[%c0_4, %c0_5] : memref<16x128xf32, #tpu.memory_space<vmem>>, vector<16x128xf32>
    %c0_6 = arith.constant 0 : index
    %c0_7 = arith.constant 0 : index
    %6 = vector.load %arg5[%c0_6, %c0_7] : memref<16x128xf32, #tpu.memory_space<vmem>>, vector<16x128xf32>
    %c0_8 = arith.constant 0 : index
    %c0_9 = arith.constant 0 : index
    %7 = vector.load %arg6[%c0_8, %c0_9] : memref<16x128xf32, #tpu.memory_space<vmem>>, vector<16x128xf32>
    %c0_10 = arith.constant 0 : index
    %c0_11 = arith.constant 0 : index
    %8 = vector.load %arg7[%c0_10, %c0_11] : memref<16x128xf32, #tpu.memory_space<vmem>>, vector<16x128xf32>
    %9 = math.log %3 : vector<16x128xf32>
    %10 = arith.mulf %9, %4 : vector<16x128xf32>
    %cst = arith.constant -3.906250e-03 : f32
    %11 = vector.broadcast %cst : f32 to vector<16x128xf32>
    %12 = arith.mulf %10, %11 : vector<16x128xf32>
    %13 = math.log %5 : vector<16x128xf32>
    %14 = arith.mulf %13, %6 : vector<16x128xf32>
    %cst_12 = arith.constant -3.906250e-03 : f32
    %15 = vector.broadcast %cst_12 : f32 to vector<16x128xf32>
    %16 = arith.mulf %14, %15 : vector<16x128xf32>
    %17 = arith.addf %12, %16 : vector<16x128xf32>
    %18 = arith.subf %7, %8 : vector<16x128xf32>
    %19 = arith.mulf %18, %18 : vector<16x128xf32>
    %cst_13 = arith.constant 0.09765625 : f32
    %20 = vector.broadcast %cst_13 : f32 to vector<16x128xf32>
    %21 = arith.mulf %19, %20 : vector<16x128xf32>
    %22 = arith.addf %17, %21 : vector<16x128xf32>
    %c0_14 = arith.constant 0 : index
    %c0_15 = arith.constant 0 : index
    %c0_16 = arith.constant 0 : index
    %23 = vector.load %arg8[%c0_14, %c0_15, %c0_16] : memref<1x8x128xf32, #tpu.memory_space<vmem>>, vector<1x8x128xf32>
    %24 = vector.shape_cast %23 : vector<1x8x128xf32> to vector<8x128xf32>
    %25 = vector.shape_cast %22 : vector<16x128xf32> to vector<2x8x128xf32>
    %cst_17 = arith.constant dense<0.000000e+00> : vector<8x128xf32>
    %26 = vector.multi_reduction <add>, %25, %cst_17 [0] : vector<2x8x128xf32> to vector<8x128xf32>
    %27 = arith.addf %24, %26 : vector<8x128xf32>
    %c0_18 = arith.constant 0 : index
    %c0_19 = arith.constant 0 : index
    %c0_20 = arith.constant 0 : index
    %28 = vector.load %arg8[%c0_18, %c0_19, %c0_20] : memref<1x8x128xf32, #tpu.memory_space<vmem>>, vector<1x8x128xf32>
    %29 = vector.shape_cast %28 : vector<1x8x128xf32> to vector<8x128xf32>
    %30 = vector.shape_cast %27 : vector<8x128xf32> to vector<1x8x128xf32>
    tpu.vector_store %arg8[%c0_18, %c0_19, %c0_20], %30 {strides = array<i32>} : memref<1x8x128xf32, #tpu.memory_space<vmem>>, vector<1x8x128xf32>,
    return
  }
  func.func @transform_0(%arg0: i32, %arg1: i32) -> (i32, i32) {
    %c1_i32 = arith.constant 1 : i32
    %0 = arith.muli %arg0, %c1_i32 : i32
    %1 = arith.addi %0, %arg1 : i32
    %c0_i32 = arith.constant 0 : i32
    %2 = arith.minsi %1, %c0_i32 : i32
    %c0_i32_0 = arith.constant 0 : i32
    %c0_i32_1 = arith.constant 0 : i32
    return %2, %c0_i32_0 : i32, i32
  }
  func.func @transform_1(%arg0: i32, %arg1: i32) -> (i32, i32) {
    %c1_i32 = arith.constant 1 : i32
    %0 = arith.muli %arg0, %c1_i32 : i32
    %1 = arith.addi %0, %arg1 : i32
    %c0_i32 = arith.constant 0 : i32
    %2 = arith.minsi %1, %c0_i32 : i32
    %c0_i32_0 = arith.constant 0 : i32
    %c0_i32_1 = arith.constant 0 : i32
    return %2, %c0_i32_0 : i32, i32
  }
  func.func @transform_2(%arg0: i32, %arg1: i32) -> (i32, i32) {
    %c1_i32 = arith.constant 1 : i32
    %0 = arith.muli %arg0, %c1_i32 : i32
    %1 = arith.addi %0, %arg1 : i32
    %c0_i32 = arith.constant 0 : i32
    %2 = arith.minsi %1, %c0_i32 : i32
    %c0_i32_0 = arith.constant 0 : i32
    %c0_i32_1 = arith.constant 0 : i32
    return %2, %c0_i32_0 : i32, i32
  }
  func.func @transform_3(%arg0: i32, %arg1: i32) -> (i32, i32) {
    %c1_i32 = arith.constant 1 : i32
    %0 = arith.muli %arg0, %c1_i32 : i32
    %1 = arith.addi %0, %arg1 : i32
    %c0_i32 = arith.constant 0 : i32
    %2 = arith.minsi %1, %c0_i32 : i32
    %c0_i32_0 = arith.constant 0 : i32
    %c0_i32_1 = arith.constant 0 : i32
    return %2, %c0_i32_0 : i32, i32
  }
  func.func @transform_4(%arg0: i32, %arg1: i32) -> (i32, i32) {
    %c1_i32 = arith.constant 1 : i32
    %0 = arith.muli %arg0, %c1_i32 : i32
    %1 = arith.addi %0, %arg1 : i32
    %c0_i32 = arith.constant 0 : i32
    %2 = arith.minsi %1, %c0_i32 : i32
    %c0_i32_0 = arith.constant 0 : i32
    %c0_i32_1 = arith.constant 0 : i32
    return %2, %c0_i32_0 : i32, i32
  }
  func.func @transform_5(%arg0: i32, %arg1: i32) -> (i32, i32) {
    %c1_i32 = arith.constant 1 : i32
    %0 = arith.muli %arg0, %c1_i32 : i32
    %1 = arith.addi %0, %arg1 : i32
    %c0_i32 = arith.constant 0 : i32
    %2 = arith.minsi %1, %c0_i32 : i32
    %c0_i32_0 = arith.constant 0 : i32
    %c0_i32_1 = arith.constant 0 : i32
    return %2, %c0_i32_0 : i32, i32
  }
  func.func @transform_6(%arg0: i32, %arg1: i32) -> (i32, i32, i32) {
    %c0_i32 = arith.constant 0 : i32
    %c0_i32_0 = arith.constant 0 : i32
    %c0_i32_1 = arith.constant 0 : i32
    return %arg0, %c0_i32, %c0_i32_0 : i32, i32, i32
  }
}

</mosaic_0001>

<llo_original>
// kernel: ml_loss.1
$region0: #{ml_loss.1}
  #allocation0 [shape = 'u32[]', space=smem, size = 0x4, offset = 0x4, fixed_abs, tag = 'smem constant byte address 0x4 - core index']
  #allocation1 [shape = 'u32[144,128]{1,0:T(1,128)}', space=vmem, size = 0x12000, scoped, tag = 'internal scratch']
  %s0 = inlined_call_operand.vmem [shape: f32[16,128], index: 0, kind: input, shape index: {}]
  %s1 = inlined_call_operand.vmem [shape: f32[16,128], index: 1, kind: input, shape index: {}]
  %s2 = inlined_call_operand.vmem [shape: f32[16,128], index: 2, kind: input, shape index: {}]
  %s3 = inlined_call_operand.vmem [shape: f32[16,128], index: 3, kind: input, shape index: {}]
  %s4 = inlined_call_operand.vmem [shape: f32[16,128], index: 4, kind: input, shape index: {}]
  %s5 = inlined_call_operand.vmem [shape: f32[16,128], index: 5, kind: input, shape index: {}]
  %s6 = inlined_call_operand.vmem [shape: f32[1,8,128], index: 6, kind: output, shape index: {}]
  %s7 = sld [smem:[#allocation0]]
  $region38: #{ml_loss.1} parent=0
    _
  %s9 = ssub.s32 1, %s7
  %s10 = scalar_select 0, %s9, %s7
  // Predicated region
  $region2: #{ml_loss.1} parent=0 // pred_check
    _
  $region3: #{ml_loss.1} parent=0 // pred_check_branch
    %12 = sbr.rel (0) target = $region5
  $region4: #{ml_loss.1} parent=0 // pred_region
    %s13 = sadd.s32 0, 0
    %p14 = scmp.lt.s32.totalorder %s13, 0
    %s15 = scalar_select %p14, %s13, 0
    %s16 = smul.u32 2, %s15
    %p17 = scmp.lt.s32.totalorder %s16, 1
    %s18 = scalar_select %p17, %s16, 1
    %s19 = smul.addr %s18, 8
    %s20 = scalar_lea.vmem %s0, %s19
    %s21 = sadd.s32 0, 0
    %p22 = scmp.lt.s32.totalorder %s21, 0
    %s23 = scalar_select %p22, %s21, 0
    %s24 = smul.u32 2, %s23
  $region5: #{ml_loss.1} parent=0 // pred_fallthru
    _
  // Predicated region
  $region6: #{ml_loss.1} parent=0 // pred_check
    _
  $region7: #{ml_loss.1} parent=0 // pred_check_branch
    %26 = sbr.rel (0) target = $region9
  $region8: #{ml_loss.1} parent=0 // pred_region
    %s27 = sadd.s32 0, 0
    %p28 = scmp.lt.s32.totalorder %s27, 0
    %s29 = scalar_select %p28, %s27, 0
    %s30 = smul.u32 2, %s29
    %p31 = scmp.lt.s32.totalorder %s30, 1
    %s32 = scalar_select %p31, %s30, 1
    %s33 = smul.addr %s32, 8
    %s34 = scalar_lea.vmem %s1, %s33
    %s35 = sadd.s32 0, 0
    %p36 = scmp.lt.s32.totalorder %s35, 0
    %s37 = scalar_select %p36, %s35, 0
    %s38 = smul.u32 2, %s37
  $region9: #{ml_loss.1} parent=0 // pred_fallthru
    _
  // Predicated region
  $region10: #{ml_loss.1} parent=0 // pred_check
    _
  $region11: #{ml_loss.1} parent=0 // pred_check_branch
    %40 = sbr.rel (0) target = $region13
  $region12: #{ml_loss.1} parent=0 // pred_region
    %s41 = sadd.s32 0, 0
    %p42 = scmp.lt.s32.totalorder %s41, 0
    %s43 = scalar_select %p42, %s41, 0
    %s44 = smul.u32 2, %s43
    %p45 = scmp.lt.s32.totalorder %s44, 1
    %s46 = scalar_select %p45, %s44, 1
    %s47 = smul.addr %s46, 8
    %s48 = scalar_lea.vmem %s2, %s47
    %s49 = sadd.s32 0, 0
    %p50 = scmp.lt.s32.totalorder %s49, 0
    %s51 = scalar_select %p50, %s49, 0
    %s52 = smul.u32 2, %s51
  $region13: #{ml_loss.1} parent=0 // pred_fallthru
    _
  // Predicated region
  $region14: #{ml_loss.1} parent=0 // pred_check
    _
  $region15: #{ml_loss.1} parent=0 // pred_check_branch
    %54 = sbr.rel (0) target = $region17
  $region16: #{ml_loss.1} parent=0 // pred_region
    %s55 = sadd.s32 0, 0
    %p56 = scmp.lt.s32.totalorder %s55, 0
    %s57 = scalar_select %p56, %s55, 0
    %s58 = smul.u32 2, %s57
    %p59 = scmp.lt.s32.totalorder %s58, 1
    %s60 = scalar_select %p59, %s58, 1
    %s61 = smul.addr %s60, 8
    %s62 = scalar_lea.vmem %s3, %s61
    %s63 = sadd.s32 0, 0
    %p64 = scmp.lt.s32.totalorder %s63, 0
    %s65 = scalar_select %p64, %s63, 0
    %s66 = smul.u32 2, %s65
  $region17: #{ml_loss.1} parent=0 // pred_fallthru
    _
  // Predicated region
  $region18: #{ml_loss.1} parent=0 // pred_check
    _
  $region19: #{ml_loss.1} parent=0 // pred_check_branch
    %68 = sbr.rel (0) target = $region21
  $region20: #{ml_loss.1} parent=0 // pred_region
    %s69 = sadd.s32 0, 0
    %p70 = scmp.lt.s32.totalorder %s69, 0
    %s71 = scalar_select %p70, %s69, 0
    %s72 = smul.u32 2, %s71
    %p73 = scmp.lt.s32.totalorder %s72, 1
    %s74 = scalar_select %p73, %s72, 1
    %s75 = smul.addr %s74, 8
    %s76 = scalar_lea.vmem %s4, %s75
    %s77 = sadd.s32 0, 0
    %p78 = scmp.lt.s32.totalorder %s77, 0
    %s79 = scalar_select %p78, %s77, 0
    %s80 = smul.u32 2, %s79
  $region21: #{ml_loss.1} parent=0 // pred_fallthru
    _
  // Predicated region
  $region22: #{ml_loss.1} parent=0 // pred_check
    _
  $region23: #{ml_loss.1} parent=0 // pred_check_branch
    %82 = sbr.rel (0) target = $region25
  $region24: #{ml_loss.1} parent=0 // pred_region
    %s83 = sadd.s32 0, 0
    %p84 = scmp.lt.s32.totalorder %s83, 0
    %s85 = scalar_select %p84, %s83, 0
    %s86 = smul.u32 2, %s85
    %p87 = scmp.lt.s32.totalorder %s86, 1
    %s88 = scalar_select %p87, %s86, 1
    %s89 = smul.addr %s88, 8
    %s90 = scalar_lea.vmem %s5, %s89
    %s91 = sadd.s32 0, 0
    %p92 = scmp.lt.s32.totalorder %s91, 0
    %s93 = scalar_select %p92, %s91, 0
    %s94 = smul.u32 2, %s93
  $region25: #{ml_loss.1} parent=0 // pred_fallthru
    _
  %s95 = sadd.s32 0, 0
  %p96 = scmp.lt.s32.totalorder %s95, 0
  %s97 = scalar_select %p96, %s95, 0
  %s98 = smul.u32 2, %s97
  %p99 = scmp.lt.s32.totalorder %s98, 1
  %s100 = scalar_select %p99, %s98, 1
  %s101 = smul.addr %s100, 8
  %s102 = scalar_lea.vmem %s0, %s101
  %s103 = sadd.s32 0, 0
  %p104 = scmp.lt.s32.totalorder %s103, 0
  %s105 = scalar_select %p104, %s103, 0
  %s106 = smul.u32 2, %s105
  %p107 = scmp.lt.s32.totalorder %s106, 1
  %s108 = scalar_select %p107, %s106, 1
  %s109 = smul.addr %s108, 8
  %s110 = scalar_lea.vmem %s1, %s109
  %s111 = sadd.s32 0, 0
  %p112 = scmp.lt.s32.totalorder %s111, 0
  %s113 = scalar_select %p112, %s111, 0
  %s114 = smul.u32 2, %s113
  %p115 = scmp.lt.s32.totalorder %s114, 1
  %s116 = scalar_select %p115, %s114, 1
  %s117 = smul.addr %s116, 8
  %s118 = scalar_lea.vmem %s2, %s117
  %s119 = sadd.s32 0, 0
  %p120 = scmp.lt.s32.totalorder %s119, 0
  %s121 = scalar_select %p120, %s119, 0
  %s122 = smul.u32 2, %s121
  %p123 = scmp.lt.s32.totalorder %s122, 1
  %s124 = scalar_select %p123, %s122, 1
  %s125 = smul.addr %s124, 8
  %s126 = scalar_lea.vmem %s3, %s125
  %s127 = sadd.s32 0, 0
  %p128 = scmp.lt.s32.totalorder %s127, 0
  %s129 = scalar_select %p128, %s127, 0
  %s130 = smul.u32 2, %s129
  %p131 = scmp.lt.s32.totalorder %s130, 1
  %s132 = scalar_select %p131, %s130, 1
  %s133 = smul.addr %s132, 8
  %s134 = scalar_lea.vmem %s4, %s133
  %s135 = sadd.s32 0, 0
  %p136 = scmp.lt.s32.totalorder %s135, 0
  %s137 = scalar_select %p136, %s135, 0
  %s138 = smul.u32 2, %s137
  %p139 = scmp.lt.s32.totalorder %s138, 1
  %s140 = scalar_select %p139, %s138, 1
  %s141 = smul.addr %s140, 8
  %s142 = scalar_lea.vmem %s5, %s141
  %s143 = sadd.s32 0, 0
  %p144 = scmp.lt.s32.totalorder %s143, 0
  %s145 = scalar_select %p144, %s143, 0
  %s146 = smul.u32 2, %s145
  %p147 = scmp.lt.s32.totalorder %s146, 1
  %s148 = scalar_select %p147, %s146, 1
  %s149 = smul.addr %s148, 8
  %s150 = scalar_lea.vmem %s0, %s149
  %s151 = sadd.s32 0, 0
  %p152 = scmp.lt.s32.totalorder %s151, 0
  %s153 = scalar_select %p152, %s151, 0
  %s154 = smul.u32 2, %s153
  %s155 = sadd.s32 0, 0
  %p156 = scmp.lt.s32.totalorder %s155, 0
  %s157 = scalar_select %p156, %s155, 0
  %s158 = smul.u32 2, %s157
  %p159 = scmp.lt.s32.totalorder %s158, 1
  %s160 = scalar_select %p159, %s158, 1
  %s161 = smul.addr %s160, 8
  %s162 = scalar_lea.vmem %s1, %s161
  %s163 = sadd.s32 0, 0
  %p164 = scmp.lt.s32.totalorder %s163, 0
  %s165 = scalar_select %p164, %s163, 0
  %s166 = smul.u32 2, %s165
  %s167 = sadd.s32 0, 0
  %p168 = scmp.lt.s32.totalorder %s167, 0
  %s169 = scalar_select %p168, %s167, 0
  %s170 = smul.u32 2, %s169
  %p171 = scmp.lt.s32.totalorder %s170, 1
  %s172 = scalar_select %p171, %s170, 1
  %s173 = smul.addr %s172, 8
  %s174 = scalar_lea.vmem %s2, %s173
  %s175 = sadd.s32 0, 0
  %p176 = scmp.lt.s32.totalorder %s175, 0
  %s177 = scalar_select %p176, %s175, 0
  %s178 = smul.u32 2, %s177
  %s179 = sadd.s32 0, 0
  %p180 = scmp.lt.s32.totalorder %s179, 0
  %s181 = scalar_select %p180, %s179, 0
  %s182 = smul.u32 2, %s181
  %p183 = scmp.lt.s32.totalorder %s182, 1
  %s184 = scalar_select %p183, %s182, 1
  %s185 = smul.addr %s184, 8
  %s186 = scalar_lea.vmem %s3, %s185
  %s187 = sadd.s32 0, 0
  %p188 = scmp.lt.s32.totalorder %s187, 0
  %s189 = scalar_select %p188, %s187, 0
  %s190 = smul.u32 2, %s189
  %s191 = sadd.s32 0, 0
  %p192 = scmp.lt.s32.totalorder %s191, 0
  %s193 = scalar_select %p192, %s191, 0
  %s194 = smul.u32 2, %s193
  %p195 = scmp.lt.s32.totalorder %s194, 1
  %s196 = scalar_select %p195, %s194, 1
  %s197 = smul.addr %s196, 8
  %s198 = scalar_lea.vmem %s4, %s197
  %s199 = sadd.s32 0, 0
  %p200 = scmp.lt.s32.totalorder %s199, 0
  %s201 = scalar_select %p200, %s199, 0
  %s202 = smul.u32 2, %s201
  %s203 = sadd.s32 0, 0
  %p204 = scmp.lt.s32.totalorder %s203, 0
  %s205 = scalar_select %p204, %s203, 0
  %s206 = smul.u32 2, %s205
  %p207 = scmp.lt.s32.totalorder %s206, 1
  %s208 = scalar_select %p207, %s206, 1
  %s209 = smul.addr %s208, 8
  %s210 = scalar_lea.vmem %s5, %s209
  %s211 = sadd.s32 0, 0
  %p212 = scmp.lt.s32.totalorder %s211, 0
  %s213 = scalar_select %p212, %s211, 0
  %s214 = smul.u32 2, %s213
  %p215 = scmp.eq.s32.totalorder 0, 0
  // Predicated region
  $region26: #{ml_loss.1} parent=0 // pred_check
    %p216 = pneg %p215
  $region27: #{ml_loss.1} parent=0 // pred_check_branch
    %218 = sbr.rel (%p216) target = $region29
  $region28: #{ml_loss.1} parent=0 // pred_region
    %219 = vst [vmem:[%s6] sm:$0xff] 0.0
  $region29: #{ml_loss.1} parent=0 // pred_fallthru
    _
  %v220 = vld [vmem:[%s150] sm:$0xff]
  %v221 = vld [vmem:[%s150 + $0x8] sm:$0xff]
  %v222 = vld [vmem:[%s162] sm:$0xff]
  %v223 = vld [vmem:[%s162 + $0x8] sm:$0xff]
  %v224 = vld [vmem:[%s174] sm:$0xff]
  %v225 = vld [vmem:[%s174 + $0x8] sm:$0xff]
  %v226 = vld [vmem:[%s186] sm:$0xff]
  %v227 = vld [vmem:[%s186 + $0x8] sm:$0xff]
  %v228 = vld [vmem:[%s198] sm:$0xff]
  %v229 = vld [vmem:[%s198 + $0x8] sm:$0xff]
  %v230 = vld [vmem:[%s210] sm:$0xff]
  %v231 = vld [vmem:[%s210 + $0x8] sm:$0xff]
  %v232 = vlog2.pop %v220
  %v233 = vmul.f32 %v232, 0.6931472
  %v234 = vlog2.pop %v221
  %v235 = vmul.f32 %v234, 0.6931472
  %v236 = vmul.f32 %v233, %v222
  %v237 = vmul.f32 %v235, %v223
  %v238 = vmul.f32 %v236, -0.00390625
  %v239 = vmul.f32 %v237, -0.00390625
  %v240 = vlog2.pop %v224
  %v241 = vmul.f32 %v240, 0.6931472
  %v242 = vlog2.pop %v225
  %v243 = vmul.f32 %v242, 0.6931472
  %v244 = vmul.f32 %v241, %v226
  %v245 = vmul.f32 %v243, %v227
  %v246 = vmul.f32 %v244, -0.00390625
  %v247 = vmul.f32 %v245, -0.00390625
  %v248 = vadd.f32 %v238, %v246
  %v249 = vadd.f32 %v239, %v247
  %v250 = vsub.f32 %v228, %v230
  %v251 = vsub.f32 %v229, %v231
  %v252 = vmul.f32 %v250, %v250
  %v253 = vmul.f32 %v251, %v251
  %v254 = vmul.f32 %v252, 0.09765625
  %v255 = vmul.f32 %v253, 0.09765625
  %v256 = vadd.f32 %v248, %v254
  %v257 = vadd.f32 %v249, %v255
  %v258 = vld [vmem:[%s6] sm:$0xff]
  %v259 = vadd.f32 %v256, %v257
  %v260 = vadd.f32 %v258, %v259
  %261 = vst [vmem:[%s6] sm:$0xff] %v260
  // Predicated region
  $region30: #{ml_loss.1} parent=0 // pred_check
    _
  $region31: #{ml_loss.1} parent=0 // pred_check_branch
    %263 = sbr.rel (0) target = $region33
  $region32: #{ml_loss.1} parent=0 // pred_region
    _
  $region33: #{ml_loss.1} parent=0 // pred_fallthru
    _
  // Predicated region
  $region34: #{ml_loss.1} parent=0 // pred_check
    _
  $region35: #{ml_loss.1} parent=0 // pred_check_branch
    %265 = sbr.rel (0) target = $region37
  $region36: #{ml_loss.1} parent=0 // pred_region
    _
  $region37: #{ml_loss.1} parent=0 // pred_fallthru
    _

</llo_original>
